<compile_context>
chip_gen: v7x
topology: tpu7x:2x2x1
jax: 0.10.0
libtpu: 0.0.40
codegen_flags: <defaults>
</compile_context>

<pallas_src>
import functools

import jax
import jax.numpy as jnp
from jax import lax
from jax.experimental import pallas as pl
from jax.experimental.pallas import tpu as pltpu


def _round_up(x, m):
    return (x + m - 1) // m * m


def _sepconv_kernel(x_ref, w_ref, b_ref, o_ref, *, KH, KW, Wp, L_out,
                    operand_dtype):
    """One batch element per grid step; one fused MXU matmul.

    x_ref : (1, C_pad, L_src)      flat zero-padded image, lane axis = Hp*Wp
    w_ref : (O_pad, KH*KW*C_pad)   depthwise-folded-into-pointwise weights
    b_ref : (O_pad, 1)             pointwise bias (f32)
    o_ref : (1, O_pad, L_out)      lane-dense output slab in padded coords
    """
    x = x_ref[0]                                   # (C_pad, L_src)
    if x.dtype != operand_dtype:
        x = x.astype(operand_dtype)

    # im2col staging with M in the lane axis: slab row (kh*KW + kw)*C_pad + c
    # is the flat image shifted by s = kh*Wp + kw.  Static lane-axis slices;
    # kh / kw never touch the sublane axis.
    pieces = []
    for kh in range(KH):
        for kw in range(KW):
            s = kh * Wp + kw
            pieces.append(x[:, s:s + L_out])
    slab = jnp.concatenate(pieces, axis=0)         # (KH*KW*C_pad, L_out)

    # Single MXU matmul, f32 accumulation; result is already lane-dense.
    acc = lax.dot_general(
        w_ref[...], slab,
        dimension_numbers=(((1,), (0,)), ((), ())),
        preferred_element_type=jnp.float32)        # (O_pad, L_out)

    o_ref[0] = (acc + b_ref[...]).astype(o_ref.dtype)


def separable_conv2d(x_nchw, dw_weight, pw_weight, pw_bias, *, padding=0,
                     use_bf16_operands=False):
    """Forward pass of SeparableConv2d (stride=1, dilation=1, D=1).

    x_nchw   : (N, C, H, W)
    dw_weight: (C, 1, KH, KW)   PyTorch depthwise conv weight (groups=C)
    pw_weight: (O, C, 1, 1)     PyTorch pointwise conv weight
    pw_bias  : (O,)
    returns  : (N, O, Ho, Wo) with Ho = H + 2*padding - KH + 1 (stride 1)
    """
    N, C, H, W = x_nchw.shape
    KH, KW = dw_weight.shape[2], dw_weight.shape[3]
    O = pw_weight.shape[0]
    assert dw_weight.shape[0] == C and pw_weight.shape[1] == C  # D == 1 only

    Hp, Wp = H + 2 * padding, W + 2 * padding
    Ho, Wo = Hp - KH + 1, Wp - KW + 1
    assert Ho > 0 and Wo > 0

    C_pad = _round_up(C, 8)                        # sublane-aligned channels
    O_pad = _round_up(O, 8)                        # unmasked output sublanes
    L_out = _round_up(Ho * Wp, 128)                # lane-dense output length
    S_MAX = (KH - 1) * Wp + (KW - 1)               # largest tap shift
    L_src = _round_up(L_out + S_MAX, 128)          # >= Hp*Wp by construction
    R = KH * KW * C_pad                            # fused contraction depth

    operand_dtype = jnp.bfloat16 if use_bf16_operands else jnp.float32

    # ---- plain-JAX glue (no transpose; pads + reshape fuse into one pass) ----
    x_pad = jnp.pad(x_nchw, ((0, 0), (0, C_pad - C),
                             (padding, padding), (padding, padding)))
    x_flat = x_pad.reshape(N, C_pad, Hp * Wp)
    x_flat = jnp.pad(x_flat, ((0, 0), (0, 0), (0, L_src - Hp * Wp)))
    x_flat = x_flat.astype(operand_dtype)

    # Fold depthwise into pointwise: w_fold[o, (kh*KW+kw)*C_pad + c]
    #   = dw[c, kh, kw] * pw[o, c]   (zero for padded o / c).
    dw = dw_weight.reshape(C, KH, KW)
    pw = pw_weight.reshape(O, C)
    w_tap = jnp.transpose(dw, (1, 2, 0))[:, :, None, :] * pw[None, None, :, :]
    w_tap = jnp.pad(w_tap, ((0, 0), (0, 0), (0, O_pad - O), (0, C_pad - C)))
    w_fold = (jnp.transpose(w_tap, (2, 0, 1, 3))
              .reshape(O_pad, R).astype(operand_dtype))
    b_fold = jnp.pad(pw_bias, (0, O_pad - O)).reshape(O_pad, 1).astype(jnp.float32)

    kernel = functools.partial(_sepconv_kernel, KH=KH, KW=KW, Wp=Wp,
                               L_out=L_out, operand_dtype=operand_dtype)

    out = pl.pallas_call(
        kernel,
        out_shape=jax.ShapeDtypeStruct((N, O_pad, L_out), x_nchw.dtype),
        grid_spec=pltpu.PrefetchScalarGridSpec(
            num_scalar_prefetch=0,
            grid=(N,),
            in_specs=[
                pl.BlockSpec((1, C_pad, L_src), lambda n: (n, 0, 0)),
                pl.BlockSpec((O_pad, R), lambda n: (0, 0)),
                pl.BlockSpec((O_pad, 1), lambda n: (0, 0)),
            ],
            out_specs=pl.BlockSpec((1, O_pad, L_out), lambda n: (n, 0, 0)),
        ),
        compiler_params=pltpu.CompilerParams(
            dimension_semantics=("parallel",),
            vmem_limit_bytes=32 * 1024 * 1024),
    )(x_flat, w_fold, b_fold)

    # Padded-coordinate slab (N, O_pad, L_out) -> (N, O, Ho, Wo): slice + reshape.
    return out[:, :O, :Ho * Wp].reshape(N, O, Ho, Wp)[:, :, :, :Wo]


def _reference(x_nchw, dw_weight, pw_weight, pw_bias, *, padding=0):
    """Pure-JAX reference using lax.conv_general_dilated (matches PyTorch)."""
    C = x_nchw.shape[1]
    dn = ("NCHW", "OIHW", "NCHW")
    y = lax.conv_general_dilated(
        x_nchw, dw_weight, window_strides=(1, 1),
        padding=((padding, padding), (padding, padding)),
        dimension_numbers=dn, feature_group_count=C)
    y = lax.conv_general_dilated(
        y, pw_weight, window_strides=(1, 1), padding="VALID",
        dimension_numbers=dn)
    return y + pw_bias[None, :, None, None]


if __name__ == "__main__":
    # Module config: SeparableConv2d(in_channels=4, out_channels=8,
    #                                kernel_size=3, padding=1, bias=True, D=1)
    N, C, H, W = 2, 4, 16, 16
    O, K, PAD = 8, 3, 1

    key = jax.random.PRNGKey(0)
    k_x, k_dw, k_pw, k_b = jax.random.split(key, 4)

    x = jax.random.normal(k_x, (N, C, H, W), dtype=jnp.float32)
    dw_weight = 0.1 * jax.random.normal(k_dw, (C * 1, 1, K, K), dtype=jnp.float32)
    pw_weight = 0.1 * jax.random.normal(k_pw, (O, C * 1, 1, 1), dtype=jnp.float32)
    pw_bias = 0.1 * jax.random.normal(k_b, (O,), dtype=jnp.float32)

    ref = _reference(x, dw_weight, pw_weight, pw_bias, padding=PAD)

    # f32 path (default): matches the PyTorch module at tight tolerance.
    out = separable_conv2d(x, dw_weight, pw_weight, pw_bias, padding=PAD)
    out = jax.block_until_ready(out)
    assert out.shape == (N, O, H, W), out.shape
    assert jnp.allclose(out, ref, atol=1e-5, rtol=1e-5), \
        float(jnp.max(jnp.abs(out - ref)))

    # Optional bf16-operand MXU path (v6e/v7x throughput): f32 accumulation,
    # looser tolerance.
    out_bf16 = separable_conv2d(x, dw_weight, pw_weight, pw_bias, padding=PAD,
                                use_bf16_operands=True)
    out_bf16 = jax.block_until_ready(out_bf16)
    assert jnp.allclose(out_bf16, ref, atol=3e-2, rtol=3e-2), \
        float(jnp.max(jnp.abs(out_bf16 - ref)))

    print("KERNEL_OK")
</pallas_src>

<mosaic_0001>
module attributes {stable_mosaic.version = 11 : i64} {
  func.func @_sepconv_kernel(%arg0: i32, %arg1: memref<1x8x512xf32, #tpu.memory_space<vmem>>, %arg2: memref<8x72xf32, #tpu.memory_space<vmem>>, %arg3: memref<8x1xf32, #tpu.memory_space<vmem>>, %arg4: memref<1x8x384xf32, #tpu.memory_space<vmem>>) attributes {dimension_semantics = [#tpu.dimension_semantics<parallel>], iteration_bounds = array<i64: 2>, scalar_prefetch = 0 : i64, scratch_operands = 0 : i64, tpu.core_type = #tpu.core_type<tc>, window_params = [{transform_indices = @transform_0, window_bounds = array<i64: 1, 8, 512>}, {pipeline_mode = #tpu.pipeline_mode<synchronous>, transform_indices = @transform_1, window_bounds = array<i64: 8, 72>}, {pipeline_mode = #tpu.pipeline_mode<synchronous>, transform_indices = @transform_2, window_bounds = array<i64: 8, 1>}, {transform_indices = @transform_3, window_bounds = array<i64: 1, 8, 384>}]} {
    %c0 = arith.constant 0 : index
    %c0_0 = arith.constant 0 : index
    %c0_1 = arith.constant 0 : index
    %0 = vector.load %arg1[%c0, %c0_0, %c0_1] : memref<1x8x512xf32, #tpu.memory_space<vmem>>, vector<1x8x512xf32>
    %1 = vector.shape_cast %0 : vector<1x8x512xf32> to vector<8x512xf32>
    %2 = vector.extract_strided_slice %1 {offsets = [0, 0], sizes = [8, 384], strides = [1, 1]} : vector<8x512xf32> to vector<8x384xf32>
    %3 = vector.extract_strided_slice %1 {offsets = [0, 1], sizes = [8, 384], strides = [1, 1]} : vector<8x512xf32> to vector<8x384xf32>
    %4 = vector.extract_strided_slice %1 {offsets = [0, 2], sizes = [8, 384], strides = [1, 1]} : vector<8x512xf32> to vector<8x384xf32>
    %5 = vector.extract_strided_slice %1 {offsets = [0, 18], sizes = [8, 384], strides = [1, 1]} : vector<8x512xf32> to vector<8x384xf32>
    %6 = vector.extract_strided_slice %1 {offsets = [0, 19], sizes = [8, 384], strides = [1, 1]} : vector<8x512xf32> to vector<8x384xf32>
    %7 = vector.extract_strided_slice %1 {offsets = [0, 20], sizes = [8, 384], strides = [1, 1]} : vector<8x512xf32> to vector<8x384xf32>
    %8 = vector.extract_strided_slice %1 {offsets = [0, 36], sizes = [8, 384], strides = [1, 1]} : vector<8x512xf32> to vector<8x384xf32>
    %9 = vector.extract_strided_slice %1 {offsets = [0, 37], sizes = [8, 384], strides = [1, 1]} : vector<8x512xf32> to vector<8x384xf32>
    %10 = vector.extract_strided_slice %1 {offsets = [0, 38], sizes = [8, 384], strides = [1, 1]} : vector<8x512xf32> to vector<8x384xf32>
    %11 = tpu.concatenate %2, %3, %4, %5, %6, %7, %8, %9, %10 in 0 : vector<8x384xf32>, vector<8x384xf32>, vector<8x384xf32>, vector<8x384xf32>, vector<8x384xf32>, vector<8x384xf32>, vector<8x384xf32>, vector<8x384xf32>, vector<8x384xf32> -> vector<72x384xf32>
    %c0_2 = arith.constant 0 : index
    %c0_3 = arith.constant 0 : index
    %12 = vector.load %arg2[%c0_2, %c0_3] : memref<8x72xf32, #tpu.memory_space<vmem>>, vector<8x72xf32>
    %cst = arith.constant dense<0.000000e+00> : vector<8x384xf32>
    %13 = tpu.matmul %12, %11, %cst {dimension_numbers = #tpu.dot_dimension_numbers<[1], [0], [0], [1], [0, 0, 1, 1], [], []>} : vector<8x72xf32>, vector<72x384xf32>, vector<8x384xf32> -> vector<8x384xf32>
    %c0_4 = arith.constant 0 : index
    %c0_5 = arith.constant 0 : index
    %14 = vector.load %arg3[%c0_4, %c0_5] : memref<8x1xf32, #tpu.memory_space<vmem>>, vector<8x1xf32>
    %15 = vector.broadcast %14 : vector<8x1xf32> to vector<8x384xf32>
    %16 = arith.addf %13, %15 : vector<8x384xf32>
    %c0_6 = arith.constant 0 : index
    %c0_7 = arith.constant 0 : index
    %c0_8 = arith.constant 0 : index
    %17 = vector.load %arg4[%c0_6, %c0_7, %c0_8] : memref<1x8x384xf32, #tpu.memory_space<vmem>>, vector<1x8x384xf32>
    %18 = vector.shape_cast %17 : vector<1x8x384xf32> to vector<8x384xf32>
    %19 = vector.shape_cast %16 : vector<8x384xf32> to vector<1x8x384xf32>
    tpu.vector_store %arg4[%c0_6, %c0_7, %c0_8], %19 {strides = array<i32>} : memref<1x8x384xf32, #tpu.memory_space<vmem>>, vector<1x8x384xf32>,
    return
  }
  func.func @transform_0(%arg0: i32) -> (i32, i32, i32) {
    %c0_i32 = arith.constant 0 : i32
    %c0_i32_0 = arith.constant 0 : i32
    %c0_i32_1 = arith.constant 0 : i32
    return %arg0, %c0_i32, %c0_i32_0 : i32, i32, i32
  }
  func.func @transform_1(%arg0: i32) -> (i32, i32) {
    %c0_i32 = arith.constant 0 : i32
    %c0_i32_0 = arith.constant 0 : i32
    %c0_i32_1 = arith.constant 0 : i32
    return %c0_i32, %c0_i32_0 : i32, i32
  }
  func.func @transform_2(%arg0: i32) -> (i32, i32) {
    %c0_i32 = arith.constant 0 : i32
    %c0_i32_0 = arith.constant 0 : i32
    %c0_i32_1 = arith.constant 0 : i32
    return %c0_i32, %c0_i32_0 : i32, i32
  }
  func.func @transform_3(%arg0: i32) -> (i32, i32, i32) {
    %c0_i32 = arith.constant 0 : i32
    %c0_i32_0 = arith.constant 0 : i32
    %c0_i32_1 = arith.constant 0 : i32
    return %arg0, %c0_i32, %c0_i32_0 : i32, i32, i32
  }
}

</mosaic_0001>

<llo_original>
// kernel: tpu_custom_call.1
$region0: #{tpu_custom_call.1}
  #allocation0 [shape = 'u32[]', space=smem, size = 0x4, offset = 0x4, fixed_abs, tag = 'smem constant byte address 0x4 - core index']
  #allocation1 [shape = 'u32[144,128]{1,0:T(1,128)}', space=vmem, size = 0x12000, scoped, tag = 'internal scratch']
  %s0 = inlined_call_operand.hbm [shape: f32[2,8,512], index: 0, kind: input, shape index: {}]
  %s1 = inlined_call_operand.vmem [shape: f32[8,72], index: 1, kind: input, shape index: {}]
  %s2 = inlined_call_operand.vmem [shape: f32[8,1], index: 2, kind: input, shape index: {}]
  %s3 = inlined_call_operand.hbm [shape: f32[2,8,384], index: 3, kind: output, shape index: {}]
  %s4 = sld [smem:[#allocation0]]
  $region49: #{tpu_custom_call.1} parent=0
    _
  %s6 = ssub.s32 1, %s4
  %s7 = scalar_select 0, %s6, %s4
  $region1: #{tpu_custom_call.1} parent=0
    #allocation2 [shape = 'u8[32768]{0}', space=vmem, size = 0x8000, scoped, tag = 'input window, operand 0']
    #allocation3 [shape = 's32[2]{0}', space=sflag, size = 0x8, scoped, tag = 'scoped memory for tpu_custom_call.1']
    #allocation4 [shape = 's32[2]{0}', space=sflag, size = 0x8, scoped, tag = 'scoped memory for tpu_custom_call.1']
    #allocation5 [shape = 'u8[24576]{0}', space=vmem, size = 0x6000, scoped, tag = 'output window, operand 0']
    %8 = vsyncpa [#allocation3], 0
    %s9 = scalar_lea.sflag [#allocation3], 1
    %10 = vsyncpa %s9, 0
    %11 = vsyncpa [#allocation4], 0
    %s12 = scalar_lea.sflag [#allocation4], 1
    %13 = vsyncpa %s12, 0
    loop: start=0, step=1, limit=4
    $region2: #{tpu_custom_call.1} parent=1 // loop_pre_header
      _
    $region3: #{tpu_custom_call.1} parent=1 // loop_header
      %s15 = sphi 0, %s19
      %p16 = scmp.ge.s32.totalorder %s15, 4
      %s25 = sphi 0, %s27
      %s28 = sphi 0, %s25
      %s29 = sphi 0, %s28
      %s45 = sphi 0, %s29
      %s49 = sphi 0, %s49
      %s51 = sphi 0, %s49
      %s52 = sphi 0, %s51
      %s66 = sphi 0, %s52
      %s70 = sphi 0, %s70
      %s72 = sphi 0, %s70
      %s73 = sphi 0, %s72
      %s87 = sphi 0, %s73
      %s93 = sphi 0, %s95
      %s96 = sphi 0, %s93
      %s97 = sphi 0, %s96
      %s113 = sphi 0, %s97
    $region4: #{tpu_custom_call.1} parent=1 // loop_header_branch
      %18 = sbr.rel (%p16) target = $region8
    $region5: #{tpu_custom_call.1} parent=1 // loop_body
      %s20 = ssub.s32 %s15, 1
      %s21 = ssub.s32 %s15, 2
      %s22 = sadd.s32 %s15, 1
      %s23 = ssub.s32 %s15, %s22
      %p24 = scmp.eq.s32.totalorder %s23, 0
      %s26 = sadd.s32 %s25, 1
      %s27 = scalar_select %p24, %s25, %s26
      %p30 = pneg %p24
      %p31 = scmp.eq.s32.totalorder %s15, 1
      %p32 = por %p30, %p31
      %p33 = scmp.ne.s32.totalorder %s25, %s28
      %p34 = scmp.eq.s32.totalorder %s15, 0
      %p35 = por %p33, %p34
      %p36 = scmp.ne.s32.totalorder %s25, %s28
      %p37 = scmp.eq.s32.totalorder %s20, 1
      %p38 = por %p36, %p37
      %p39 = scmp.ne.s32.totalorder %s28, %s29
      %p40 = scmp.eq.s32.totalorder %s20, 0
      %p41 = por %p39, %p40
      %p42 = scmp.ne.s32.totalorder %s28, %s29
      %p43 = scmp.eq.s32.totalorder %s21, 1
      %p44 = por %p42, %p43
      %p46 = scmp.ne.s32.totalorder %s29, %s45
      %p47 = scmp.eq.s32.totalorder %s21, 0
      %p48 = por %p46, %p47
      %s50 = sadd.s32 %s49, 1
      %p53 = scmp.eq.s32.totalorder %s15, 1
      %p54 = scmp.ne.s32.totalorder %s49, %s51
      %p55 = scmp.eq.s32.totalorder %s15, 0
      %p56 = por %p54, %p55
      %p57 = scmp.ne.s32.totalorder %s49, %s51
      %p58 = scmp.eq.s32.totalorder %s20, 1
      %p59 = por %p57, %p58
      %p60 = scmp.ne.s32.totalorder %s51, %s52
      %p61 = scmp.eq.s32.totalorder %s20, 0
      %p62 = por %p60, %p61
      %p63 = scmp.ne.s32.totalorder %s51, %s52
      %p64 = scmp.eq.s32.totalorder %s21, 1
      %p65 = por %p63, %p64
      %p67 = scmp.ne.s32.totalorder %s52, %s66
      %p68 = scmp.eq.s32.totalorder %s21, 0
      %p69 = por %p67, %p68
      %s71 = sadd.s32 %s70, 1
      %p74 = scmp.eq.s32.totalorder %s15, 1
      %p75 = scmp.ne.s32.totalorder %s70, %s72
      %p76 = scmp.eq.s32.totalorder %s15, 0
      %p77 = por %p75, %p76
      %p78 = scmp.ne.s32.totalorder %s70, %s72
      %p79 = scmp.eq.s32.totalorder %s20, 1
      %p80 = por %p78, %p79
      %p81 = scmp.ne.s32.totalorder %s72, %s73
      %p82 = scmp.eq.s32.totalorder %s20, 0
      %p83 = por %p81, %p82
      %p84 = scmp.ne.s32.totalorder %s72, %s73
      %p85 = scmp.eq.s32.totalorder %s21, 1
      %p86 = por %p84, %p85
      %p88 = scmp.ne.s32.totalorder %s73, %s87
      %p89 = scmp.eq.s32.totalorder %s21, 0
      %p90 = por %p88, %p89
      %s91 = ssub.s32 %s15, %s22
      %p92 = scmp.eq.s32.totalorder %s91, 0
      %s94 = sadd.s32 %s93, 1
      %s95 = scalar_select %p92, %s93, %s94
      %p98 = pneg %p92
      %p99 = scmp.eq.s32.totalorder %s15, 1
      %p100 = por %p98, %p99
      %p101 = scmp.ne.s32.totalorder %s93, %s96
      %p102 = scmp.eq.s32.totalorder %s15, 0
      %p103 = por %p101, %p102
      %p104 = scmp.ne.s32.totalorder %s93, %s96
      %p105 = scmp.eq.s32.totalorder %s20, 1
      %p106 = por %p104, %p105
      %p107 = scmp.ne.s32.totalorder %s96, %s97
      %p108 = scmp.eq.s32.totalorder %s20, 0
      %p109 = por %p107, %p108
      %p110 = scmp.ne.s32.totalorder %s96, %s97
      %p111 = scmp.eq.s32.totalorder %s21, 1
      %p112 = por %p110, %p111
      %p114 = scmp.ne.s32.totalorder %s97, %s113
      %p115 = scmp.eq.s32.totalorder %s21, 0
      %p116 = por %p114, %p115
      %p117 = scmp.le.s32.totalorder 1, %s15
      %p118 = scmp.lt.s32.totalorder %s15, 3
      %p119 = pnand %p117, %p118
      %p120 = pneg %p119
      // Predicated region
      $region9: #{tpu_custom_call.1} parent=5 // pred_check
        _
      $region10: #{tpu_custom_call.1} parent=5 // pred_check_branch
        %122 = sbr.rel (%p119) target = $region12
      $region11: #{tpu_custom_call.1} parent=5 // pred_region
        %s123 = ssub.s32 %s15, 1
        // Predicated region
        $region13: #{tpu_custom_call.1} parent=11 // pred_check
          %p124 = pneg %p62
        $region14: #{tpu_custom_call.1} parent=11 // pred_check_branch
          %126 = sbr.rel (%p124) target = $region16
        $region15: #{tpu_custom_call.1} parent=11 // pred_region
          _
        $region16: #{tpu_custom_call.1} parent=11 // pred_fallthru
          _
        // Predicated region
        $region17: #{tpu_custom_call.1} parent=11 // pred_check
          %p127 = pneg %p83
        $region18: #{tpu_custom_call.1} parent=11 // pred_check_branch
          %129 = sbr.rel (%p127) target = $region20
        $region19: #{tpu_custom_call.1} parent=11 // pred_region
          _
        $region20: #{tpu_custom_call.1} parent=11 // pred_fallthru
          _
      $region12: #{tpu_custom_call.1} parent=5 // pred_fallthru
        _
      %p130 = scmp.lt.s32.totalorder %s15, 2
      // Predicated region
      $region21: #{tpu_custom_call.1} parent=5 // pred_check
        %p131 = pneg %p130
      $region22: #{tpu_custom_call.1} parent=5 // pred_check_branch
        %133 = sbr.rel (%p131) target = $region24
      $region23: #{tpu_custom_call.1} parent=5 // pred_region
        // Predicated region
        $region25: #{tpu_custom_call.1} parent=23 // pred_check
          %p134 = pneg %p35
        $region26: #{tpu_custom_call.1} parent=23 // pred_check_branch
          %136 = sbr.rel (%p134) target = $region28
        $region27: #{tpu_custom_call.1} parent=23 // pred_region
          %s137 = sand.u32 %s25, 1
          %s138 = scalar_lea.sflag [#allocation3], %s137
          %s139 = sand.u32 %s25, 1
          %s140 = smul.addr %s139, 32
          %s141 = scalar_lea.vmem [#allocation2], %s140
          %s143 = ssub.s32 512, 512
          %144 = vsyncadd %s138, %s143
          %s145 = smul.addr %s15, 4
          %s146 = smul.addr %s145, 128
          %s147 = scalar_lea.hbm %s0, %s146
          %s149 = sshll.u32 %s141, 4
          %s150 = int_to_ptr.vmem [resolvable:$true] %s149
          %152 = dma.hbm_to_vmem [thread:$0]  %s147, 512, %s150, %s138
        $region28: #{tpu_custom_call.1} parent=23 // pred_fallthru
          _
      $region24: #{tpu_custom_call.1} parent=5 // pred_fallthru
        _
      %p153 = scmp.le.s32.totalorder 1, %s15
      %p154 = scmp.lt.s32.totalorder %s15, 3
      %p155 = pnand %p153, %p154
      %p156 = pneg %p155
      // Predicated region
      $region29: #{tpu_custom_call.1} parent=5 // pred_check
        _
      $region30: #{tpu_custom_call.1} parent=5 // pred_check_branch
        %158 = sbr.rel (%p155) target = $region32
      $region31: #{tpu_custom_call.1} parent=5 // pred_region
        %s159 = ssub.s32 %s15, 1
        %s160 = sand.u32 %s28, 1
        %s161 = scalar_lea.sflag [#allocation3], %s160
        %s162 = sand.u32 %s28, 1
        %s163 = smul.addr %s162, 32
        %s164 = scalar_lea.vmem [#allocation2], %s163
        // Predicated region
        $region33: #{tpu_custom_call.1} parent=31 // pred_check
          %p165 = pneg %p41
        $region34: #{tpu_custom_call.1} parent=31 // pred_check_branch
          %167 = sbr.rel (%p165) target = $region36
        $region35: #{tpu_custom_call.1} parent=31 // pred_region
          %168 = dma.done %s161, 512
        $region36: #{tpu_custom_call.1} parent=31 // pred_fallthru
          _
        %s169 = sand.u32 %s28, 1
        %s170 = scalar_lea.sflag [#allocation3], %s169
        %s171 = sand.u32 %s28, 1
        %s172 = smul.addr %s171, 32
        %s173 = scalar_lea.vmem [#allocation2], %s172
        %p174 = pneg %p41
        %p175 = pneg %p38
        %p176 = pneg %p62
        %p177 = pneg %p59
        %p178 = pneg %p83
        %p179 = pneg %p80
        %p180 = pneg %p109
        %p181 = pneg %p106
        %s182 = sand.u32 %s96, 1
        %s183 = scalar_lea.sflag [#allocation4], %s182
        %s184 = sand.u32 %s96, 1
        %s185 = smul.addr %s184, 24
        %s186 = scalar_lea.vmem [#allocation5], %s185
        %v187 = vld [vmem:[%s164] sm:$0xff]
        %v188 = vld [vmem:[%s164 + $0x8] sm:$0xff]
        %v189 = vld [vmem:[%s164 + $0x10] sm:$0xff]
        %v190 = vld [vmem:[%s164 + $0x18] sm:$0xff]
        %195 = vrot.lane.b32.xlu0 %v187, 127
        %v196 = vpop.permute.xlu0 %195
        %197 = vrot.lane.b32.xlu0 %v188, 127
        %v198 = vpop.permute.xlu0 %197
        %199 = vrot.lane.b32.xlu0 %v189, 127
        %v200 = vpop.permute.xlu0 %199
        %201 = vrot.lane.b32.xlu0 %v190, 127
        %v202 = vpop.permute.xlu0 %201
        %vm203 = vcmask 1039360
        %v204 = vsel %vm203, %v196, %v198
        %v205 = vsel %vm203, %v198, %v200
        %v206 = vsel %vm203, %v200, %v202
        %210 = vrot.lane.b32.xlu0 %v187, 126
        %v211 = vpop.permute.xlu0 %210
        %212 = vrot.lane.b32.xlu0 %v188, 126
        %v213 = vpop.permute.xlu0 %212
        %214 = vrot.lane.b32.xlu0 %v189, 126
        %v215 = vpop.permute.xlu0 %214
        %216 = vrot.lane.b32.xlu0 %v190, 126
        %v217 = vpop.permute.xlu0 %216
        %vm218 = vcmask 1031168
        %v219 = vsel %vm218, %v211, %v213
        %v220 = vsel %vm218, %v213, %v215
        %v221 = vsel %vm218, %v215, %v217
        %225 = vrot.lane.b32.xlu0 %v187, 110
        %v226 = vpop.permute.xlu0 %225
        %227 = vrot.lane.b32.xlu0 %v188, 110
        %v228 = vpop.permute.xlu0 %227
        %229 = vrot.lane.b32.xlu0 %v189, 110
        %v230 = vpop.permute.xlu0 %229
        %231 = vrot.lane.b32.xlu0 %v190, 110
        %v232 = vpop.permute.xlu0 %231
        %vm233 = vcmask 900096
        %v234 = vsel %vm233, %v226, %v228
        %v235 = vsel %vm233, %v228, %v230
        %v236 = vsel %vm233, %v230, %v232
        %240 = vrot.lane.b32.xlu0 %v187, 109
        %v241 = vpop.permute.xlu0 %240
        %242 = vrot.lane.b32.xlu0 %v188, 109
        %v243 = vpop.permute.xlu0 %242
        %244 = vrot.lane.b32.xlu0 %v189, 109
        %v245 = vpop.permute.xlu0 %244
        %246 = vrot.lane.b32.xlu0 %v190, 109
        %v247 = vpop.permute.xlu0 %246
        %vm248 = vcmask 891904
        %v249 = vsel %vm248, %v241, %v243
        %v250 = vsel %vm248, %v243, %v245
        %v251 = vsel %vm248, %v245, %v247
        %255 = vrot.lane.b32.xlu0 %v187, 108
        %v256 = vpop.permute.xlu0 %255
        %257 = vrot.lane.b32.xlu0 %v188, 108
        %v258 = vpop.permute.xlu0 %257
        %259 = vrot.lane.b32.xlu0 %v189, 108
        %v260 = vpop.permute.xlu0 %259
        %261 = vrot.lane.b32.xlu0 %v190, 108
        %v262 = vpop.permute.xlu0 %261
        %vm263 = vcmask 883712
        %v264 = vsel %vm263, %v256, %v258
        %v265 = vsel %vm263, %v258, %v260
        %v266 = vsel %vm263, %v260, %v262
        %270 = vrot.lane.b32.xlu0 %v187, 92
        %v271 = vpop.permute.xlu0 %270
        %272 = vrot.lane.b32.xlu0 %v188, 92
        %v273 = vpop.permute.xlu0 %272
        %274 = vrot.lane.b32.xlu0 %v189, 92
        %v275 = vpop.permute.xlu0 %274
        %276 = vrot.lane.b32.xlu0 %v190, 92
        %v277 = vpop.permute.xlu0 %276
        %vm278 = vcmask 752640
        %v279 = vsel %vm278, %v271, %v273
        %v280 = vsel %vm278, %v273, %v275
        %v281 = vsel %vm278, %v275, %v277
        %285 = vrot.lane.b32.xlu0 %v187, 91
        %v286 = vpop.permute.xlu0 %285
        %287 = vrot.lane.b32.xlu0 %v188, 91
        %v288 = vpop.permute.xlu0 %287
        %289 = vrot.lane.b32.xlu0 %v189, 91
        %v290 = vpop.permute.xlu0 %289
        %291 = vrot.lane.b32.xlu0 %v190, 91
        %v292 = vpop.permute.xlu0 %291
        %vm293 = vcmask 744448
        %v294 = vsel %vm293, %v286, %v288
        %v295 = vsel %vm293, %v288, %v290
        %v296 = vsel %vm293, %v290, %v292
        %300 = vrot.lane.b32.xlu0 %v187, 90
        %v301 = vpop.permute.xlu0 %300
        %302 = vrot.lane.b32.xlu0 %v188, 90
        %v303 = vpop.permute.xlu0 %302
        %304 = vrot.lane.b32.xlu0 %v189, 90
        %v305 = vpop.permute.xlu0 %304
        %306 = vrot.lane.b32.xlu0 %v190, 90
        %v307 = vpop.permute.xlu0 %306
        %vm308 = vcmask 736256
        %v309 = vsel %vm308, %v301, %v303
        %v310 = vsel %vm308, %v303, %v305
        %v311 = vsel %vm308, %v305, %v307
        %v315 = vld [vmem:[%s1] sm:$0xff]
        %v316 = vld [vmem:[%s2] sm:$0xff]
        %318 = vset.pattern.permute.xlu0 0
        %319 = vperm.xlu0 %318, %v316
        %v320 = vpop.permute.xlu0 %319
        %vm322 = vcmask 588800
        %v324 = vsel %vm322, %v315, 0
        %326 = vmatprep.subr.mxu0 %v188
        %327 = vmatpush1.msra.mxu0 %v187
        %328 = vmatprep.subr.mxu0 %v205
        %329 = vmatpush1.msra.mxu0 %v204
        %330 = vmatprep.subr.mxu0 %v220
        %331 = vmatpush1.msra.mxu0 %v219
        %332 = vmatprep.subr.mxu0 %v235
        %333 = vmatpush1.msra.mxu0 %v234
        %334 = vmatprep.subr.mxu0 %v250
        %335 = vmatpush1.msra.mxu0 %v249
        %336 = vmatprep.subr.mxu0 %v265
        %337 = vmatpush1.msra.mxu0 %v264
        %338 = vmatprep.subr.mxu0 %v280
        %339 = vmatpush1.msra.mxu0 %v279
        %340 = vmatprep.subr.mxu0 %v295
        %341 = vmatpush1.msra.mxu0 %v294
        %342 = vmatprep.subr.mxu0 %v310
        %343 = vmatpush1.msra.mxu0 %v309
        %344 = vmatprep.subr.mxu0 0.0
        %345 = vmatpush1.msra.mxu0 0.0
        %346 = vmatprep.subr.mxu0 0.0
        %347 = vmatpush1.msra.mxu0 0.0
        %348 = vmatprep.subr.mxu0 0.0
        %349 = vmatpush1.msra.mxu0 0.0
        %350 = vmatprep.subr.mxu0 0.0
        %351 = vmatpush1.msra.mxu0 0.0
        %352 = vmatprep.subr.mxu0 0.0
        %353 = vmatpush1.msra.mxu0 0.0
        %354 = vmatprep.subr.mxu0 0.0
        %355 = vmatpush1.msra.mxu0 0.0
        %356 = vmatprep.subr.mxu0 0.0
        %357 = vmatpush1.msra.mxu0 0.0
        %358 = vmatprep.subr.mxu0 0.0
        %359 = vmatpush1.msra.mxu0 0.0
        %360 = vmatprep.subr.mxu0 0.0
        %361 = vmatpush1.msra.mxu0 0.0
        %362 = vmatprep.subr.mxu0 0.0
        %363 = vmatpush1.msra.mxu0 0.0
        %364 = vmatprep.subr.mxu0 0.0
        %365 = vmatpush1.msra.mxu0 0.0
        %366 = vmatprep.subr.mxu0 0.0
        %367 = vmatpush1.msra.mxu0 0.0
        %368 = vmatprep.subr.mxu0 0.0
        %369 = vmatpush1.msra.mxu0 0.0
        %370 = vmatprep.subr.mxu0 0.0
        %371 = vmatpush1.msra.mxu0 0.0
        %372 = vmatprep.subr.mxu0 0.0
        %373 = vmatpush1.msra.mxu0 0.0
        %374 = vmatprep.subr.mxu0 0.0
        %375 = vmatpush1.msra.mxu0 0.0
        %376 = vmatprep.subr.mxu0 0.0
        %377 = vmatpush1.msra.mxu0 0.0
        %378 = vmatprep.subr.mxu0 0.0
        %379 = vmatpush1.msra.mxu0 0.0
        %380 = vmatprep.subr.mxu0 0.0
        %381 = vmatpush1.msra.mxu0 0.0
        %382 = vmatprep.subr.mxu0 0.0
        %383 = vmatpush1.msra.mxu0 0.0
        %384 = vmatprep.subr.mxu0 0.0
        %385 = vmatpush1.msra.mxu0 0.0
        %386 = vmatprep.subr.mxu0 0.0
        %387 = vmatpush1.msra.mxu0 0.0
        %388 = vmatprep.subr.mxu0 0.0
        %389 = vmatpush1.msra.mxu0 0.0
        %390 = vmatprep.mubr.f32.mxu0 0.0
        %391 = vmatmul.mubr.f32.gmra.mrb[0].mxu0 %v324
        %v392 = vpop.f32.mrb[0].mxu0
        %v393 = vadd.f32 %v320, %v392
        %v394 = vpop.f32.mrb[0].mxu0
        %v395 = vadd.f32 %v320, %v394
        %396 = vdwg.mxu0
        %397 = vmatprep.subr.mxu0 0.0
        %398 = vmatpush1.msra.mxu0 %v189
        %399 = vmatprep.subr.mxu0 0.0
        %400 = vmatpush1.msra.mxu0 %v206
        %401 = vmatprep.subr.mxu0 0.0
        %402 = vmatpush1.msra.mxu0 %v221
        %403 = vmatprep.subr.mxu0 0.0
        %404 = vmatpush1.msra.mxu0 %v236
        %405 = vmatprep.subr.mxu0 0.0
        %406 = vmatpush1.msra.mxu0 %v251
        %407 = vmatprep.subr.mxu0 0.0
        %408 = vmatpush1.msra.mxu0 %v266
        %409 = vmatprep.subr.mxu0 0.0
        %410 = vmatpush1.msra.mxu0 %v281
        %411 = vmatprep.subr.mxu0 0.0
        %412 = vmatpush1.msra.mxu0 %v296
        %413 = vmatprep.subr.mxu0 0.0
        %414 = vmatpush1.msra.mxu0 %v311
        %415 = vmatprep.subr.mxu0 0.0
        %416 = vmatpush1.msra.mxu0 0.0
        %417 = vmatprep.subr.mxu0 0.0
        %418 = vmatpush1.msra.mxu0 0.0
        %419 = vmatprep.subr.mxu0 0.0
        %420 = vmatpush1.msra.mxu0 0.0
        %421 = vmatprep.subr.mxu0 0.0
        %422 = vmatpush1.msra.mxu0 0.0
        %423 = vmatprep.subr.mxu0 0.0
        %424 = vmatpush1.msra.mxu0 0.0
        %425 = vmatprep.subr.mxu0 0.0
        %426 = vmatpush1.msra.mxu0 0.0
        %427 = vmatprep.subr.mxu0 0.0
        %428 = vmatpush1.msra.mxu0 0.0
        %429 = vmatprep.subr.mxu0 0.0
        %430 = vmatpush1.msra.mxu0 0.0
        %431 = vmatprep.subr.mxu0 0.0
        %432 = vmatpush1.msra.mxu0 0.0
        %433 = vmatprep.subr.mxu0 0.0
        %434 = vmatpush1.msra.mxu0 0.0
        %435 = vmatprep.subr.mxu0 0.0
        %436 = vmatpush1.msra.mxu0 0.0
        %437 = vmatprep.subr.mxu0 0.0
        %438 = vmatpush1.msra.mxu0 0.0
        %439 = vmatprep.subr.mxu0 0.0
        %440 = vmatpush1.msra.mxu0 0.0
        %441 = vmatprep.subr.mxu0 0.0
        %442 = vmatpush1.msra.mxu0 0.0
        %443 = vmatprep.subr.mxu0 0.0
        %444 = vmatpush1.msra.mxu0 0.0
        %445 = vmatprep.subr.mxu0 0.0
        %446 = vmatpush1.msra.mxu0 0.0
        %447 = vmatprep.subr.mxu0 0.0
        %448 = vmatpush1.msra.mxu0 0.0
        %449 = vmatprep.subr.mxu0 0.0
        %450 = vmatpush1.msra.mxu0 0.0
        %451 = vmatprep.subr.mxu0 0.0
        %452 = vmatpush1.msra.mxu0 0.0
        %453 = vmatprep.subr.mxu0 0.0
        %454 = vmatpush1.msra.mxu0 0.0
        %455 = vmatprep.subr.mxu0 0.0
        %456 = vmatpush1.msra.mxu0 0.0
        %457 = vmatprep.subr.mxu0 0.0
        %458 = vmatpush1.msra.mxu0 0.0
        %459 = vmatprep.subr.mxu0 0.0
        %460 = vmatpush1.msra.mxu0 0.0
        %461 = vmatprep.mubr.f32.mxu0 0.0
        %462 = vmatmul.mubr.f32.gmra.mrb[0].mxu0 %v324
        %v463 = vpop.f32.mrb[0].mxu0
        %v464 = vadd.f32 %v320, %v463
        %v465 = vpop.f32.mrb[0].mxu0
        %466 = vdwg.mxu0
        %467 = vst [vmem:[%s186] sm:$0xff] %v393
        %468 = vst [vmem:[%s186 + $0x8] sm:$0xff] %v395
        %469 = vst [vmem:[%s186 + $0x10] sm:$0xff] %v464
        %s470 = sand.u32 %s96, 1
        %s471 = scalar_lea.sflag [#allocation4], %s470
        %s472 = sand.u32 %s96, 1
        %s473 = smul.addr %s472, 24
        %s474 = scalar_lea.vmem [#allocation5], %s473
        // Predicated region
        $region37: #{tpu_custom_call.1} parent=31 // pred_check
          %p475 = pneg %p106
        $region38: #{tpu_custom_call.1} parent=31 // pred_check_branch
          %477 = sbr.rel (%p475) target = $region40
        $region39: #{tpu_custom_call.1} parent=31 // pred_region
          %s479 = ssub.s32 384, 384
          %480 = vsyncadd %s471, %s479
          %s481 = smul.addr %s20, 3
          %s482 = smul.addr %s481, 128
          %s483 = scalar_lea.hbm %s3, %s482
          %s485 = sshll.u32 %s474, 4
          %s486 = int_to_ptr.vmem [resolvable:$true] %s485
          %488 = dma.vmem_to_hbm [thread:$0]  %s486, 384, %s483, %s471
        $region40: #{tpu_custom_call.1} parent=31 // pred_fallthru
          _
      $region32: #{tpu_custom_call.1} parent=5 // pred_fallthru
        _
      %p489 = scmp.le.s32.totalorder 2, %s15
      // Predicated region
      $region41: #{tpu_custom_call.1} parent=5 // pred_check
        %p490 = pneg %p489
      $region42: #{tpu_custom_call.1} parent=5 // pred_check_branch
        %492 = sbr.rel (%p490) target = $region44
      $region43: #{tpu_custom_call.1} parent=5 // pred_region
        %s493 = ssub.s32 %s15, 2
        // Predicated region
        $region45: #{tpu_custom_call.1} parent=43 // pred_check
          %p494 = pneg %p112
        $region46: #{tpu_custom_call.1} parent=43 // pred_check_branch
          %496 = sbr.rel (%p494) target = $region48
        $region47: #{tpu_custom_call.1} parent=43 // pred_region
          %s497 = sand.u32 %s97, 1
          %s498 = scalar_lea.sflag [#allocation4], %s497
          %s499 = sand.u32 %s97, 1
          %s500 = smul.addr %s499, 24
          %s501 = scalar_lea.vmem [#allocation5], %s500
          %502 = dma.done %s498, 384
        $region48: #{tpu_custom_call.1} parent=43 // pred_fallthru
          _
      $region44: #{tpu_custom_call.1} parent=5 // pred_fallthru
        _
    $region6: #{tpu_custom_call.1} parent=1 // loop_footer
      %s19 = sadd.s32 1, %s15
    $region7: #{tpu_custom_call.1} parent=1 // loop_footer_branch
      %14 = sbr.rel target = $region3
    $region8: #{tpu_custom_call.1} parent=1 // loop_exit
      _
    %503 = vsyncpa [#allocation3], 1
    %s504 = scalar_lea.sflag [#allocation3], 1
    %505 = vsyncpa %s504, 1
    %506 = vsyncpa [#allocation4], 1
    %s507 = scalar_lea.sflag [#allocation4], 1
    %508 = vsyncpa %s507, 1

</llo_original>
